<compile_context>
chip_gen: v5e
topology: v5e:2x2
jax: 0.10.0
libtpu: 0.0.40
codegen_flags: <defaults>
</compile_context>

<pallas_src>
import functools

import jax
import jax.numpy as jnp
from jax import lax
from jax.experimental import pallas as pl
from jax.experimental.pallas import tpu as pltpu


HIDDEN = 128
LANE = 128


def _round_up(n, m):
    return (n + m - 1) // m * m


def _pick_tile(B, tm_max, min_tiles=1):
    """Batch-tile size (multiple of 8) that bounds padding waste and can force
    >= `min_tiles` grid steps (v7x megacore wants >= 2 tiles)."""
    n_tiles = max(pl.cdiv(B, tm_max), min_tiles)
    tm = _round_up(pl.cdiv(B, n_tiles), 8)
    tm = min(tm, _round_up(B, 8))
    Bp = _round_up(B, tm)
    return tm, Bp


# ---------------------------------------------------------------------------
# Fused forward:  out = ReLU(x @ W1[:sd] + cond @ W1[sd:] + b1) @ W2 + b2
# (the torch.cat is folded into the two partial dots -> no extra HBM pass)
# ---------------------------------------------------------------------------
def _mlp_fwd_kernel(x_ref, c_ref, w1x_ref, w1c_ref, b1_ref, w2_ref, b2_ref,
                    o_ref, *, mxu_dtype):
    h = (jnp.dot(x_ref[...], w1x_ref[...], preferred_element_type=jnp.float32)
         + jnp.dot(c_ref[...], w1c_ref[...], preferred_element_type=jnp.float32)
         + b1_ref[...])
    h = jnp.maximum(h, 0.0)
    o_ref[...] = (
        jnp.dot(h.astype(mxu_dtype), w2_ref[...],
                preferred_element_type=jnp.float32)
        + b2_ref[...]
    ).astype(o_ref.dtype)


def diffusion_forward(x, cond, params, *, tm_max=2048, mxu_dtype=jnp.float32):
    """Pallas equivalent of DiffusionModel.forward(x, cond)."""
    w1, b1, w2, b2 = params["w1"], params["b1"], params["w2"], params["b2"]
    B, state_dim = x.shape
    cond_dim = cond.shape[1]
    in_dim, hidden = w1.shape
    out_dim = w2.shape[1]
    assert in_dim == state_dim + cond_dim

    min_tiles = 2 if B >= 16 else 1          # keep both v7x TCs busy
    tm, Bp = _pick_tile(B, tm_max, min_tiles)

    # MXU operands in mxu_dtype (bf16 halves DMA bytes on v6e/v7x);
    # biases / accumulation / elementwise stay f32.
    xq = x.astype(mxu_dtype)
    cq = cond.astype(mxu_dtype)
    if Bp != B:
        xq = jnp.pad(xq, ((0, Bp - B), (0, 0)))
        cq = jnp.pad(cq, ((0, Bp - B), (0, 0)))

    w1x = w1[:state_dim].astype(mxu_dtype)
    w1c = w1[state_dim:].astype(mxu_dtype)
    w2q = w2.astype(mxu_dtype)
    b1_2d = b1.reshape(1, hidden).astype(jnp.float32)
    b2_2d = b2.reshape(1, out_dim).astype(jnp.float32)

    esz = jnp.dtype(mxu_dtype).itemsize
    flops = 2 * Bp * (in_dim * hidden + hidden * out_dim)
    bytes_accessed = int(esz * (Bp * in_dim + in_dim * hidden + hidden * out_dim)
                         + 4 * (Bp * out_dim + hidden + out_dim))

    out = pl.pallas_call(
        functools.partial(_mlp_fwd_kernel, mxu_dtype=mxu_dtype),
        out_shape=jax.ShapeDtypeStruct((Bp, out_dim), jnp.float32),
        grid_spec=pltpu.PrefetchScalarGridSpec(
            num_scalar_prefetch=0,
            grid=(Bp // tm,),
            in_specs=[
                pl.BlockSpec((tm, state_dim), lambda i: (i, 0)),      # x tile
                pl.BlockSpec((tm, cond_dim), lambda i: (i, 0)),       # cond tile
                pl.BlockSpec((state_dim, hidden), lambda i: (0, 0)),  # W1[:sd]
                pl.BlockSpec((cond_dim, hidden), lambda i: (0, 0)),   # W1[sd:]
                pl.BlockSpec((1, hidden), lambda i: (0, 0)),          # b1
                pl.BlockSpec((hidden, out_dim), lambda i: (0, 0)),    # W2
                pl.BlockSpec((1, out_dim), lambda i: (0, 0)),         # b2
            ],
            out_specs=pl.BlockSpec((tm, out_dim), lambda i: (i, 0)),
        ),
        compiler_params=pltpu.CompilerParams(
            dimension_semantics=("parallel",)),
        cost_estimate=pl.CostEstimate(
            flops=flops, transcendentals=0, bytes_accessed=bytes_accessed),
    )(xq, cq, w1x, w1c, b1_2d, w2q, b2_2d)
    return out[:B]


# ---------------------------------------------------------------------------
# Fused sample(): the whole `steps`-iteration denoising loop in ONE pallas_call.
# State axis lane-padded to 128 so the carry / eps / output store are lane-dense.
# ---------------------------------------------------------------------------
def _sample_kernel(x0_ref, cond_ref, w1x_ref, w1c_ref, b1_ref, w2_ref, b2_ref,
                   o_ref, cond_h, *, steps, unroll, mxu_dtype):
    # Loop-invariant: cond @ W1[sd:] + b1  (cond never changes in sample()).
    cond_h[...] = (
        jnp.dot(cond_ref[...], w1c_ref[...], preferred_element_type=jnp.float32)
        + b1_ref[...]
    )

    def body(_, x):
        h = jnp.maximum(
            jnp.dot(x.astype(mxu_dtype), w1x_ref[...],
                    preferred_element_type=jnp.float32) + cond_h[...],
            0.0,
        )
        eps = (jnp.dot(h.astype(mxu_dtype), w2_ref[...],
                       preferred_element_type=jnp.float32)
               + b2_ref[...])
        return x - eps                      # f32 carry; padded lanes stay zero

    x_final = lax.fori_loop(0, steps, body,
                            x0_ref[...].astype(jnp.float32), unroll=unroll)
    o_ref[...] = x_final.astype(o_ref.dtype)


def diffusion_sample(cond, params, state_dim, steps=10, key=None, x0=None, *,
                     tm_max=1024, mxu_dtype=jnp.float32):
    """Pallas equivalent of DiffusionModel.sample(cond, steps)."""
    w1, b1, w2, b2 = params["w1"], params["b1"], params["w2"], params["b2"]
    B, cond_dim = cond.shape
    in_dim, hidden = w1.shape
    out_dim = w2.shape[1]
    assert in_dim == state_dim + cond_dim and out_dim == state_dim

    if x0 is None:
        if key is None:
            key = jax.random.PRNGKey(1)
        x0 = jax.random.normal(key, (B, state_dim), jnp.float32)

    min_tiles = 2 if B >= 16 else 1
    tm, Bp = _pick_tile(B, tm_max, min_tiles)

    # Lane-pad the state axis to a multiple of 128: zero-padded rows of W1[:sd],
    # zero-padded output cols of W2/b2, zero-padded x0 lanes.  Padded lanes of
    # eps are exactly zero, so the carry keeps zeros there for free.
    SP = _round_up(state_dim, LANE)
    w1x_pad = jnp.zeros((SP, hidden), jnp.float32).at[:state_dim].set(w1[:state_dim])
    w2_pad = jnp.zeros((hidden, SP), jnp.float32).at[:, :state_dim].set(w2)
    b2_pad = jnp.zeros((1, SP), jnp.float32).at[:, :state_dim].set(b2)
    w1c = w1[state_dim:]
    b1_2d = b1.reshape(1, hidden).astype(jnp.float32)

    w1x_pad = w1x_pad.astype(mxu_dtype)
    w1c = w1c.astype(mxu_dtype)
    w2_pad = w2_pad.astype(mxu_dtype)

    x0_pad = jnp.zeros((Bp, SP), jnp.float32).at[:B, :state_dim].set(x0)
    condp = cond.astype(mxu_dtype)
    if Bp != B:
        condp = jnp.pad(condp, ((0, Bp - B), (0, 0)))

    unroll = True if steps <= 16 else 8      # serial dep -> cap the unroll

    esz = jnp.dtype(mxu_dtype).itemsize
    flops = (2 * Bp * cond_dim * hidden
             + steps * 2 * Bp * (SP * hidden + hidden * SP))
    bytes_accessed = int(4 * Bp * (SP + SP)
                         + esz * (Bp * cond_dim + SP * hidden
                                  + cond_dim * hidden + hidden * SP)
                         + 4 * (hidden + SP))

    out = pl.pallas_call(
        functools.partial(_sample_kernel, steps=steps, unroll=unroll,
                          mxu_dtype=mxu_dtype),
        out_shape=jax.ShapeDtypeStruct((Bp, SP), jnp.float32),
        grid_spec=pltpu.PrefetchScalarGridSpec(
            num_scalar_prefetch=0,
            grid=(Bp // tm,),
            in_specs=[
                pl.BlockSpec((tm, SP), lambda i: (i, 0)),            # x0 (lane-padded)
                pl.BlockSpec((tm, cond_dim), lambda i: (i, 0)),      # cond tile
                pl.BlockSpec((SP, hidden), lambda i: (0, 0)),        # W1[:sd] padded
                pl.BlockSpec((cond_dim, hidden), lambda i: (0, 0)),  # W1[sd:]
                pl.BlockSpec((1, hidden), lambda i: (0, 0)),         # b1
                pl.BlockSpec((hidden, SP), lambda i: (0, 0)),        # W2 padded
                pl.BlockSpec((1, SP), lambda i: (0, 0)),             # b2 padded
            ],
            out_specs=pl.BlockSpec((tm, SP), lambda i: (i, 0)),
            scratch_shapes=[pltpu.VMEM((tm, hidden), jnp.float32)],  # cond_h
        ),
        compiler_params=pltpu.CompilerParams(
            dimension_semantics=("parallel",)),
        cost_estimate=pl.CostEstimate(
            flops=flops, transcendentals=0, bytes_accessed=bytes_accessed),
    )(x0_pad, condp, w1x_pad, w1c, b1_2d, w2_pad, b2_pad)
    return out[:B, :state_dim]


def init_params(key, state_dim, action_dim, hidden=HIDDEN):
    """Deterministic parameter init (nn.Linear weights, stored transposed)."""
    in_dim = state_dim + action_dim + 1
    k1, k2, k3, k4 = jax.random.split(key, 4)
    lim1 = 1.0 / jnp.sqrt(in_dim)
    lim2 = 1.0 / jnp.sqrt(hidden)
    return {
        "w1": jax.random.uniform(k1, (in_dim, hidden), jnp.float32, -lim1, lim1),
        "b1": jax.random.uniform(k2, (hidden,), jnp.float32, -lim1, lim1),
        "w2": jax.random.uniform(k3, (hidden, state_dim), jnp.float32, -lim2, lim2),
        "b2": jax.random.uniform(k4, (state_dim,), jnp.float32, -lim2, lim2),
    }


def _ref_forward(x, cond, params):
    xc = jnp.concatenate([x, cond], axis=-1)
    h = jnp.maximum(xc @ params["w1"] + params["b1"], 0.0)
    return h @ params["w2"] + params["b2"]


if __name__ == "__main__":
    state_dim = 8
    action_dim = 7          # cond dim = action_dim + 1 = 8
    batch = 8
    steps = 10

    key = jax.random.PRNGKey(0)
    kp, kx, kc, kn = jax.random.split(key, 4)
    params = init_params(kp, state_dim, action_dim)

    x = jax.random.normal(kx, (batch, state_dim), jnp.float32)
    cond = jax.random.normal(kc, (batch, action_dim + 1), jnp.float32)

    # --- forward (f32 MXU) ---
    out = diffusion_forward(x, cond, params)
    jax.block_until_ready(out)
    ref = _ref_forward(x, cond, params)
    assert out.shape == (batch, state_dim)
    assert jnp.allclose(out, ref, atol=1e-5, rtol=1e-5)

    # --- forward (bf16 MXU operands, f32 accumulate: v6e/v7x path) ---
    out_bf = diffusion_forward(x, cond, params, mxu_dtype=jnp.bfloat16)
    jax.block_until_ready(out_bf)
    assert jnp.allclose(out_bf, ref, atol=5e-2, rtol=5e-2)

    # --- sample(): whole denoising loop in one pallas_call (f32) ---
    x0 = jax.random.normal(kn, (batch, state_dim), jnp.float32)
    s = diffusion_sample(cond, params, state_dim, steps=steps, x0=x0)
    jax.block_until_ready(s)

    x_ref = x0
    for _ in range(steps):
        x_ref = x_ref - _ref_forward(x_ref, cond, params)
    assert s.shape == (batch, state_dim)
    assert jnp.allclose(s, x_ref, atol=1e-4, rtol=1e-3)

    # --- sample() with bf16 MXU operands (drift expected; scale-relative check) ---
    s_bf = diffusion_sample(cond, params, state_dim, steps=steps, x0=x0,
                            mxu_dtype=jnp.bfloat16)
    jax.block_until_ready(s_bf)
    rel_err = jnp.max(jnp.abs(s_bf - x_ref)) / (jnp.max(jnp.abs(x_ref)) + 1.0)
    assert bool(jnp.isfinite(s_bf).all()) and float(rel_err) < 0.1

    # --- padding path: batch not a multiple of 8 ---
    x_odd = jax.random.normal(kx, (batch + 3, state_dim), jnp.float32)
    cond_odd = jax.random.normal(kc, (batch + 3, action_dim + 1), jnp.float32)
    out_odd = diffusion_forward(x_odd, cond_odd, params)
    jax.block_until_ready(out_odd)
    assert jnp.allclose(out_odd, _ref_forward(x_odd, cond_odd, params),
                        atol=1e-5, rtol=1e-5)

    # --- multi-tile path (B >= 16 forces >= 2 grid tiles for v7x megacore) ---
    B2 = 20
    x_big = jax.random.normal(kx, (B2, state_dim), jnp.float32)
    cond_big = jax.random.normal(kc, (B2, action_dim + 1), jnp.float32)
    out_big = diffusion_forward(x_big, cond_big, params)
    jax.block_until_ready(out_big)
    assert jnp.allclose(out_big, _ref_forward(x_big, cond_big, params),
                        atol=1e-5, rtol=1e-5)

    x0_big = jax.random.normal(kn, (B2, state_dim), jnp.float32)
    s_big = diffusion_sample(cond_big, params, state_dim, steps=steps, x0=x0_big)
    jax.block_until_ready(s_big)
    xr = x0_big
    for _ in range(steps):
        xr = xr - _ref_forward(xr, cond_big, params)
    assert jnp.allclose(s_big, xr, atol=1e-4, rtol=1e-3)

    print("KERNEL_OK")
</pallas_src>

<mosaic_0001>
module attributes {stable_mosaic.version = 11 : i64} {
  func.func @_mlp_fwd_kernel(%arg0: i32, %arg1: memref<8x8xf32, #tpu.memory_space<vmem>>, %arg2: memref<8x8xf32, #tpu.memory_space<vmem>>, %arg3: memref<8x128xf32, #tpu.memory_space<vmem>>, %arg4: memref<8x128xf32, #tpu.memory_space<vmem>>, %arg5: memref<1x128xf32, #tpu.memory_space<vmem>>, %arg6: memref<128x8xf32, #tpu.memory_space<vmem>>, %arg7: memref<1x8xf32, #tpu.memory_space<vmem>>, %arg8: memref<8x8xf32, #tpu.memory_space<vmem>>) attributes {dimension_semantics = [#tpu.dimension_semantics<parallel>], iteration_bounds = array<i64: 1>, scalar_prefetch = 0 : i64, scratch_operands = 0 : i64, tpu.core_type = #tpu.core_type<tc>, window_params = [{transform_indices = @transform_0, window_bounds = array<i64: 8, 8>}, {transform_indices = @transform_1, window_bounds = array<i64: 8, 8>}, {pipeline_mode = #tpu.pipeline_mode<synchronous>, transform_indices = @transform_2, window_bounds = array<i64: 8, 128>}, {pipeline_mode = #tpu.pipeline_mode<synchronous>, transform_indices = @transform_3, window_bounds = array<i64: 8, 128>}, {pipeline_mode = #tpu.pipeline_mode<synchronous>, transform_indices = @transform_4, window_bounds = array<i64: 1, 128>}, {pipeline_mode = #tpu.pipeline_mode<synchronous>, transform_indices = @transform_5, window_bounds = array<i64: 128, 8>}, {pipeline_mode = #tpu.pipeline_mode<synchronous>, transform_indices = @transform_6, window_bounds = array<i64: 1, 8>}, {transform_indices = @transform_7, window_bounds = array<i64: 8, 8>}]} {
    %c0 = arith.constant 0 : index
    %c0_0 = arith.constant 0 : index
    %0 = vector.load %arg1[%c0, %c0_0] : memref<8x8xf32, #tpu.memory_space<vmem>>, vector<8x8xf32>
    %c0_1 = arith.constant 0 : index
    %c0_2 = arith.constant 0 : index
    %1 = vector.load %arg3[%c0_1, %c0_2] : memref<8x128xf32, #tpu.memory_space<vmem>>, vector<8x128xf32>
    %cst = arith.constant dense<0.000000e+00> : vector<8x128xf32>
    %2 = tpu.matmul %0, %1, %cst {dimension_numbers = #tpu.dot_dimension_numbers<[1], [0], [0], [1], [0, 0, 1, 1], [], []>} : vector<8x8xf32>, vector<8x128xf32>, vector<8x128xf32> -> vector<8x128xf32>
    %c0_3 = arith.constant 0 : index
    %c0_4 = arith.constant 0 : index
    %3 = vector.load %arg2[%c0_3, %c0_4] : memref<8x8xf32, #tpu.memory_space<vmem>>, vector<8x8xf32>
    %c0_5 = arith.constant 0 : index
    %c0_6 = arith.constant 0 : index
    %4 = vector.load %arg4[%c0_5, %c0_6] : memref<8x128xf32, #tpu.memory_space<vmem>>, vector<8x128xf32>
    %cst_7 = arith.constant dense<0.000000e+00> : vector<8x128xf32>
    %5 = tpu.matmul %3, %4, %cst_7 {dimension_numbers = #tpu.dot_dimension_numbers<[1], [0], [0], [1], [0, 0, 1, 1], [], []>} : vector<8x8xf32>, vector<8x128xf32>, vector<8x128xf32> -> vector<8x128xf32>
    %6 = arith.addf %2, %5 : vector<8x128xf32>
    %c0_8 = arith.constant 0 : index
    %c0_9 = arith.constant 0 : index
    %7 = vector.load %arg5[%c0_8, %c0_9] : memref<1x128xf32, #tpu.memory_space<vmem>>, vector<1x128xf32>
    %8 = vector.broadcast %7 : vector<1x128xf32> to vector<8x128xf32>
    %9 = arith.addf %6, %8 : vector<8x128xf32>
    %cst_10 = arith.constant 0.000000e+00 : f32
    %10 = vector.broadcast %cst_10 : f32 to vector<8x128xf32>
    %11 = arith.maximumf %9, %10 : vector<8x128xf32>
    %c0_11 = arith.constant 0 : index
    %c0_12 = arith.constant 0 : index
    %12 = vector.load %arg6[%c0_11, %c0_12] : memref<128x8xf32, #tpu.memory_space<vmem>>, vector<128x8xf32>
    %cst_13 = arith.constant dense<0.000000e+00> : vector<8x8xf32>
    %13 = tpu.matmul %11, %12, %cst_13 {dimension_numbers = #tpu.dot_dimension_numbers<[1], [0], [0], [1], [0, 0, 1, 1], [], []>} : vector<8x128xf32>, vector<128x8xf32>, vector<8x8xf32> -> vector<8x8xf32>
    %c0_14 = arith.constant 0 : index
    %c0_15 = arith.constant 0 : index
    %14 = vector.load %arg7[%c0_14, %c0_15] : memref<1x8xf32, #tpu.memory_space<vmem>>, vector<1x8xf32>
    %15 = vector.broadcast %14 : vector<1x8xf32> to vector<8x8xf32>
    %16 = arith.addf %13, %15 : vector<8x8xf32>
    %c0_16 = arith.constant 0 : index
    %c0_17 = arith.constant 0 : index
    %17 = vector.load %arg8[%c0_16, %c0_17] : memref<8x8xf32, #tpu.memory_space<vmem>>, vector<8x8xf32>
    tpu.vector_store %arg8[%c0_16, %c0_17], %16 {strides = array<i32>} : memref<8x8xf32, #tpu.memory_space<vmem>>, vector<8x8xf32>,
    return
  }
  func.func @transform_0(%arg0: i32) -> (i32, i32) {
    %c0_i32 = arith.constant 0 : i32
    %c0_i32_0 = arith.constant 0 : i32
    return %arg0, %c0_i32 : i32, i32
  }
  func.func @transform_1(%arg0: i32) -> (i32, i32) {
    %c0_i32 = arith.constant 0 : i32
    %c0_i32_0 = arith.constant 0 : i32
    return %arg0, %c0_i32 : i32, i32
  }
  func.func @transform_2(%arg0: i32) -> (i32, i32) {
    %c0_i32 = arith.constant 0 : i32
    %c0_i32_0 = arith.constant 0 : i32
    %c0_i32_1 = arith.constant 0 : i32
    return %c0_i32, %c0_i32_0 : i32, i32
  }
  func.func @transform_3(%arg0: i32) -> (i32, i32) {
    %c0_i32 = arith.constant 0 : i32
    %c0_i32_0 = arith.constant 0 : i32
    %c0_i32_1 = arith.constant 0 : i32
    return %c0_i32, %c0_i32_0 : i32, i32
  }
  func.func @transform_4(%arg0: i32) -> (i32, i32) {
    %c0_i32 = arith.constant 0 : i32
    %c0_i32_0 = arith.constant 0 : i32
    %c0_i32_1 = arith.constant 0 : i32
    return %c0_i32, %c0_i32_0 : i32, i32
  }
  func.func @transform_5(%arg0: i32) -> (i32, i32) {
    %c0_i32 = arith.constant 0 : i32
    %c0_i32_0 = arith.constant 0 : i32
    %c0_i32_1 = arith.constant 0 : i32
    return %c0_i32, %c0_i32_0 : i32, i32
  }
  func.func @transform_6(%arg0: i32) -> (i32, i32) {
    %c0_i32 = arith.constant 0 : i32
    %c0_i32_0 = arith.constant 0 : i32
    %c0_i32_1 = arith.constant 0 : i32
    return %c0_i32, %c0_i32_0 : i32, i32
  }
  func.func @transform_7(%arg0: i32) -> (i32, i32) {
    %c0_i32 = arith.constant 0 : i32
    %c0_i32_0 = arith.constant 0 : i32
    return %arg0, %c0_i32 : i32, i32
  }
}

</mosaic_0001>

<llo_original>
// kernel: tpu_custom_call.1
$region0: #{tpu_custom_call.1}
  #allocation0 [shape = 'u32[]', space=smem, size = 0x4, offset = 0x4, fixed_abs, tag = 'smem constant byte address 0x4 - core index']
  #allocation1 [shape = 'u32[72,128]{1,0:T(1,128)}', space=vmem, size = 0x9000, scoped, tag = 'internal scratch']
  %s0 = inlined_call_operand.vmem [shape: f32[8,8], index: 0, kind: input, shape index: {}]
  %s1 = inlined_call_operand.vmem [shape: f32[8,8], index: 1, kind: input, shape index: {}]
  %s2 = inlined_call_operand.vmem [shape: f32[8,128], index: 2, kind: input, shape index: {}]
  %s3 = inlined_call_operand.vmem [shape: f32[8,128], index: 3, kind: input, shape index: {}]
  %s4 = inlined_call_operand.vmem [shape: f32[1,128], index: 4, kind: input, shape index: {}]
  %s5 = inlined_call_operand.vmem [shape: f32[128,8], index: 5, kind: input, shape index: {}]
  %s6 = inlined_call_operand.vmem [shape: f32[1,8], index: 6, kind: input, shape index: {}]
  %s7 = inlined_call_operand.hbm [shape: f32[8,8], index: 7, kind: output, shape index: {}]
  %s8 = sld [smem:[#allocation0]]
  $region38: #{tpu_custom_call.1} parent=0
    _
  %s10 = ssub.s32 1, %s8
  %s11 = scalar_select 0, %s10, %s8
  $region1: #{tpu_custom_call.1} parent=0
    #allocation2 [shape = 'u8[4096]{0}', space=vmem, size = 0x1000, scoped, tag = 'output window, operand 0, single buffered']
    #allocation3 [shape = 's32[1]{0}', space=sflag, size = 0x4, scoped, tag = 'scoped memory for tpu_custom_call.1']
    %12 = vsyncpa [#allocation3], 0
    // Predicated region
    $region2: #{tpu_custom_call.1} parent=1 // pred_check
      _
    $region3: #{tpu_custom_call.1} parent=1 // pred_check_branch
      %14 = sbr.rel (0) target = $region5
    $region4: #{tpu_custom_call.1} parent=1 // pred_region
      _
    $region5: #{tpu_custom_call.1} parent=1 // pred_fallthru
      _
    // Predicated region
    $region6: #{tpu_custom_call.1} parent=1 // pred_check
      _
    $region7: #{tpu_custom_call.1} parent=1 // pred_check_branch
      %16 = sbr.rel (0) target = $region9
    $region8: #{tpu_custom_call.1} parent=1 // pred_region
      _
    $region9: #{tpu_custom_call.1} parent=1 // pred_fallthru
      _
    // Predicated region
    $region10: #{tpu_custom_call.1} parent=1 // pred_check
      _
    $region11: #{tpu_custom_call.1} parent=1 // pred_check_branch
      %18 = sbr.rel (0) target = $region13
    $region12: #{tpu_custom_call.1} parent=1 // pred_region
      _
    $region13: #{tpu_custom_call.1} parent=1 // pred_fallthru
      _
    // Predicated region
    $region14: #{tpu_custom_call.1} parent=1 // pred_check
      _
    $region15: #{tpu_custom_call.1} parent=1 // pred_check_branch
      %20 = sbr.rel (0) target = $region17
    $region16: #{tpu_custom_call.1} parent=1 // pred_region
      _
    $region17: #{tpu_custom_call.1} parent=1 // pred_fallthru
      _
    // Predicated region
    $region18: #{tpu_custom_call.1} parent=1 // pred_check
      _
    $region19: #{tpu_custom_call.1} parent=1 // pred_check_branch
      %22 = sbr.rel (0) target = $region21
    $region20: #{tpu_custom_call.1} parent=1 // pred_region
      _
    $region21: #{tpu_custom_call.1} parent=1 // pred_fallthru
      _
    // Predicated region
    $region22: #{tpu_custom_call.1} parent=1 // pred_check
      _
    $region23: #{tpu_custom_call.1} parent=1 // pred_check_branch
      %24 = sbr.rel (0) target = $region25
    $region24: #{tpu_custom_call.1} parent=1 // pred_region
      _
    $region25: #{tpu_custom_call.1} parent=1 // pred_fallthru
      _
    // Predicated region
    $region26: #{tpu_custom_call.1} parent=1 // pred_check
      _
    $region27: #{tpu_custom_call.1} parent=1 // pred_check_branch
      %26 = sbr.rel (0) target = $region29
    $region28: #{tpu_custom_call.1} parent=1 // pred_region
      _
    $region29: #{tpu_custom_call.1} parent=1 // pred_fallthru
      _
    %v27 = vld [vmem:[%s0] sm:$0xff]
    %v28 = vld [vmem:[%s2] sm:$0xff]
    %v29 = vld [vmem:[%s1] sm:$0xff]
    %v30 = vld [vmem:[%s3] sm:$0xff]
    %vm31 = vcmask 64512
    %v33 = vsel %vm31, %v29, 0
    %35 = vmatpush.msra.mxu0 0.0
    %36 = vmatpush.msra.mxu0 0.0
    %37 = vmatpush.msra.mxu0 0.0
    %38 = vmatpush.msra.mxu0 0.0
    %39 = vmatpush.msra.mxu0 0.0
    %40 = vmatpush.msra.mxu0 0.0
    %41 = vmatpush.msra.mxu0 0.0
    %42 = vmatpush.msra.mxu0 0.0
    %43 = vmatpush.msra.mxu0 0.0
    %44 = vmatpush.msra.mxu0 0.0
    %45 = vmatpush.msra.mxu0 0.0
    %46 = vmatpush.msra.mxu0 0.0
    %47 = vmatpush.msra.mxu0 0.0
    %48 = vmatpush.msra.mxu0 0.0
    %49 = vmatpush.msra.mxu0 0.0
    %50 = vmatpush.msra.mxu0 %v30
    %51 = vmatmul.f32.gmra.mxu0 %v33
    %v52 = vpop.f32.mrf.mxu0
    %v53 = vadd.f32 0.0, %v52
    %54 = vdwg.mxu0
    %v56 = vsel %vm31, %v27, 0
    %58 = vmatpush.msra.mxu0 0.0
    %59 = vmatpush.msra.mxu0 0.0
    %60 = vmatpush.msra.mxu0 0.0
    %61 = vmatpush.msra.mxu0 0.0
    %62 = vmatpush.msra.mxu0 0.0
    %63 = vmatpush.msra.mxu0 0.0
    %64 = vmatpush.msra.mxu0 0.0
    %65 = vmatpush.msra.mxu0 0.0
    %66 = vmatpush.msra.mxu0 0.0
    %67 = vmatpush.msra.mxu0 0.0
    %68 = vmatpush.msra.mxu0 0.0
    %69 = vmatpush.msra.mxu0 0.0
    %70 = vmatpush.msra.mxu0 0.0
    %71 = vmatpush.msra.mxu0 0.0
    %72 = vmatpush.msra.mxu0 0.0
    %73 = vmatpush.msra.mxu0 %v28
    %74 = vmatmul.f32.gmra.mxu0 %v56
    %v75 = vpop.f32.mrf.mxu0
    %v76 = vadd.f32 %v53, %v75
    %77 = vdwg.mxu0
    %v78 = vld [vmem:[%s4] sm:$0x1]
    %v80 = vperm.slane %v78, 0
    %v82 = vadd.f32 %v76, %v80
    %v83 = vmax.f32 %v82, 0.0
    %v84 = vld [vmem:[%s5] sm:$0xff]
    %v85 = vld [vmem:[%s5 + $0x8] sm:$0xff]
    %v86 = vld [vmem:[%s5 + $0x10] sm:$0xff]
    %v87 = vld [vmem:[%s5 + $0x18] sm:$0xff]
    %v88 = vld [vmem:[%s5 + $0x20] sm:$0xff]
    %v89 = vld [vmem:[%s5 + $0x28] sm:$0xff]
    %v90 = vld [vmem:[%s5 + $0x30] sm:$0xff]
    %v91 = vld [vmem:[%s5 + $0x38] sm:$0xff]
    %v92 = vld [vmem:[%s5 + $0x40] sm:$0xff]
    %v93 = vld [vmem:[%s5 + $0x48] sm:$0xff]
    %v94 = vld [vmem:[%s5 + $0x50] sm:$0xff]
    %v95 = vld [vmem:[%s5 + $0x58] sm:$0xff]
    %v96 = vld [vmem:[%s5 + $0x60] sm:$0xff]
    %v97 = vld [vmem:[%s5 + $0x68] sm:$0xff]
    %v98 = vld [vmem:[%s5 + $0x70] sm:$0xff]
    %v99 = vld [vmem:[%s5 + $0x78] sm:$0xff]
    %v100 = vld [vmem:[%s6] sm:$0x1]
    %v102 = vperm.slane %v100, 0
    %104 = vmatpush.msra.mxu0 %v99
    %105 = vmatpush.msra.mxu0 %v98
    %106 = vmatpush.msra.mxu0 %v97
    %107 = vmatpush.msra.mxu0 %v96
    %108 = vmatpush.msra.mxu0 %v95
    %109 = vmatpush.msra.mxu0 %v94
    %110 = vmatpush.msra.mxu0 %v93
    %111 = vmatpush.msra.mxu0 %v92
    %112 = vmatpush.msra.mxu0 %v91
    %113 = vmatpush.msra.mxu0 %v90
    %114 = vmatpush.msra.mxu0 %v89
    %115 = vmatpush.msra.mxu0 %v88
    %116 = vmatpush.msra.mxu0 %v87
    %117 = vmatpush.msra.mxu0 %v86
    %118 = vmatpush.msra.mxu0 %v85
    %119 = vmatpush.msra.mxu0 %v84
    %120 = vmatmul.f32.gmra.mxu0 %v83
    %v121 = vpop.f32.mrf.mxu0
    %v122 = vadd.f32 %v102, %v121
    %123 = vdwg.mxu0
    %124 = vst.msk [vmem:[#allocation2] sm:$0xff] %vm31, %v122
    // Predicated region
    $region30: #{tpu_custom_call.1} parent=1 // pred_check
      _
    $region31: #{tpu_custom_call.1} parent=1 // pred_check_branch
      %126 = sbr.rel (0) target = $region33
    $region32: #{tpu_custom_call.1} parent=1 // pred_region
      %128 = vsyncadd [#allocation3], 0
      %s130 = sshll.u32 [#allocation2], 4
      %s131 = int_to_ptr.vmem [resolvable:$true] %s130
      %s132 = sshll.u32 %s7, 4
      %s133 = int_to_ptr.hbm [resolvable:$true] %s132
      %135 = dma.vmem_to_hbm [thread:$0]  %s131, 128, %s133, [#allocation3]
    $region33: #{tpu_custom_call.1} parent=1 // pred_fallthru
      _
    // Predicated region
    $region34: #{tpu_custom_call.1} parent=1 // pred_check
      _
    $region35: #{tpu_custom_call.1} parent=1 // pred_check_branch
      %137 = sbr.rel (0) target = $region37
    $region36: #{tpu_custom_call.1} parent=1 // pred_region
      %139 = dma.done [#allocation3], 128
    $region37: #{tpu_custom_call.1} parent=1 // pred_fallthru
      _
    %140 = vsyncpa [#allocation3], 1

</llo_original>
